<compile_context>
chip_gen: v7x
topology: tpu7x:2x2x1
jax: 0.10.0
libtpu: 0.0.40
codegen_flags: <defaults>
</compile_context>

<pallas_src>
import jax
import jax.numpy as jnp
from jax.experimental import pallas as pl
from jax.experimental.pallas import tpu as pltpu


def _round_up(n, m):
    return ((n + m - 1) // m) * m


# ----------------------------------------------------------------------------
# Kernel: three MXU matmuls + f32 elementwise (clip / sigmoid).
# ----------------------------------------------------------------------------
def fc_net_kernel(x_ref, w1_ref, b1_ref, w5_ref, b5_ref, wo_ref, bo_ref,
                  out_ref):
    # hidden1 (BN_init folded into w1'/b1'): relu6 in f32
    h = jnp.dot(x_ref[...], w1_ref[...], preferred_element_type=jnp.float32)
    h = jnp.clip(h + b1_ref[...], 0.0, 6.0)

    # hidden5 (BN_1 folded into w5'/b5'); dropout == identity in eval
    h = jnp.dot(h.astype(w5_ref.dtype), w5_ref[...],
                preferred_element_type=jnp.float32)
    h = jnp.clip(h + b5_ref[...], 0.0, 6.0)

    # output (BN_5 folded into wo'/bo'); sigmoid in f32, lane-dense store
    o = jnp.dot(h.astype(wo_ref.dtype), wo_ref[...],
                preferred_element_type=jnp.float32)
    out_ref[...] = jax.nn.sigmoid(o + bo_ref[...])


# ----------------------------------------------------------------------------
# Host-side parameter folding (exact, done in f32).
# ----------------------------------------------------------------------------
def bn_fold(gamma, beta, mean, var, eps=1e-5):
    """BatchNorm1d (eval) as per-feature scale/shift, shape (C,)."""
    scale = gamma * jax.lax.rsqrt(var + eps)
    shift = beta - mean * scale
    return scale, shift


def _fold_params(params):
    s0, t0 = bn_fold(*params["bn0"])
    s1, t1 = bn_fold(*params["bn1"])
    s5, t5 = bn_fold(*params["bn5"])
    # PyTorch Linear stores W as (out, in); transpose to (in, out).
    w1 = params["w1"].T
    w5 = params["w5"].T
    wo = params["wo"].T
    # (x*s+t) @ W + b  ==  x @ (s[:,None]*W) + (t @ W + b)
    w1f = s0[:, None] * w1
    b1f = t0 @ w1 + params["b1"]
    w5f = s1[:, None] * w5
    b5f = t1 @ w5 + params["b5"]
    wof = s5[:, None] * wo
    bof = t5 @ wo + params["bo"]
    return w1f, b1f, w5f, b5f, wof, bof


@jax.jit
def fc_net_forward(x, params):
    B, din = x.shape
    dout = params["wo"].shape[0]

    w1f, b1f, w5f, b5f, wof, bof = _fold_params(params)

    # ---- padding for (8,128) layout alignment -----------------------------
    din_p = _round_up(din, 128)     # lane-dense K for the first matmul
    dout_p = _round_up(dout, 128)   # lane-dense N for the last matmul / store
    b8 = _round_up(B, 8)
    TB = min(512, b8)               # batch tile; small B -> single block
    Bp = _round_up(b8, TB)

    xp = jnp.pad(x, ((0, Bp - B), (0, din_p - din)))
    w1p = jnp.pad(w1f, ((0, din_p - din), (0, 0)))
    wop = jnp.pad(wof, ((0, 0), (0, dout_p - dout)))
    bop = jnp.pad(bof, (0, dout_p - dout))

    # bf16 matmul operands (folding was done in f32); biases stay f32.
    xp = xp.astype(jnp.bfloat16)
    w1p = w1p.astype(jnp.bfloat16)
    w5b = w5f.astype(jnp.bfloat16)
    wop = wop.astype(jnp.bfloat16)
    b1r = b1f[None, :].astype(jnp.float32)
    b5r = b5f[None, :].astype(jnp.float32)
    bor = bop[None, :].astype(jnp.float32)

    def full(shape):
        return pl.BlockSpec(shape, lambda i: (0, 0))

    # VMEM budget: 2x-buffered x/out tiles + resident weights + intermediates,
    # with headroom; clamp to a range safe on v5e/v6e/v7x scoped defaults.
    need = 2 * (TB * din_p * 2 + TB * dout_p * 4)           # pipelined x / out
    need += (din_p * 256 + 256 * 128 + 128 * dout_p) * 2    # bf16 weights
    need += TB * (256 + 128) * 4                            # f32 intermediates
    vmem_bytes = int(min(32 << 20, max(16 << 20, 2 * need)))

    out = pl.pallas_call(
        fc_net_kernel,
        out_shape=jax.ShapeDtypeStruct((Bp, dout_p), jnp.float32),
        grid=(Bp // TB,),
        in_specs=[
            pl.BlockSpec((TB, din_p), lambda i: (i, 0)),   # x tile (pipelined)
            full((din_p, 256)), full((1, 256)),            # w1', b1' (resident)
            full((256, 128)), full((1, 128)),              # w5', b5'
            full((128, dout_p)), full((1, dout_p)),        # wo', bo'
        ],
        out_specs=pl.BlockSpec((TB, dout_p), lambda i: (i, 0)),
        compiler_params=pltpu.CompilerParams(
            dimension_semantics=("parallel",),
            vmem_limit_bytes=vmem_bytes),
    )(xp, w1p, b1r, w5b, b5r, wop, bor)

    return out[:B, :dout]


# ----------------------------------------------------------------------------
# Deterministic synthetic params + pure-JAX reference (f32, torch semantics).
# ----------------------------------------------------------------------------
def init_params(key, input_dims, output_dims):
    ks = jax.random.split(key, 18)

    def linear(kw, kb, fan_in, fan_out):
        bound = 1.0 / jnp.sqrt(fan_in)
        w = jax.random.uniform(kw, (fan_out, fan_in), jnp.float32, -bound, bound)
        b = jax.random.uniform(kb, (fan_out,), jnp.float32, -bound, bound)
        return w, b

    def bn(kg, kb, km, kv, c):
        gamma = 1.0 + 0.1 * jax.random.normal(kg, (c,), jnp.float32)
        beta = 0.1 * jax.random.normal(kb, (c,), jnp.float32)
        mean = 0.1 * jax.random.normal(km, (c,), jnp.float32)
        var = jnp.abs(1.0 + 0.1 * jax.random.normal(kv, (c,), jnp.float32))
        return gamma, beta, mean, var

    w1, b1 = linear(ks[0], ks[1], input_dims, 256)
    w5, b5 = linear(ks[2], ks[3], 256, 128)
    wo, bo = linear(ks[4], ks[5], 128, output_dims)
    return {
        "w1": w1, "b1": b1,
        "w5": w5, "b5": b5,
        "wo": wo, "bo": bo,
        "bn0": bn(ks[6], ks[7], ks[8], ks[9], input_dims),
        "bn1": bn(ks[10], ks[11], ks[12], ks[13], 256),
        "bn5": bn(ks[14], ks[15], ks[16], ks[17], 128),
    }


def reference_forward(x, params):
    """Exact f32 eval-mode reference (matches the PyTorch module in eval())."""
    s0, t0 = bn_fold(*params["bn0"])
    s1, t1 = bn_fold(*params["bn1"])
    s5, t5 = bn_fold(*params["bn5"])
    h = x * s0 + t0
    h = jnp.clip(h @ params["w1"].T + params["b1"], 0.0, 6.0) * s1 + t1
    h = jnp.clip(h @ params["w5"].T + params["b5"], 0.0, 6.0) * s5 + t5
    return jax.nn.sigmoid(h @ params["wo"].T + params["bo"])


if __name__ == "__main__":
    key = jax.random.PRNGKey(0)
    k_x, k_p = jax.random.split(key)

    B, INPUT_DIMS, OUTPUT_DIMS = 8, 64, 8
    x = jax.random.normal(k_x, (B, INPUT_DIMS), jnp.float32)
    params = init_params(k_p, INPUT_DIMS, OUTPUT_DIMS)

    out = jax.block_until_ready(fc_net_forward(x, params))
    ref = reference_forward(x, params)

    assert out.shape == (B, OUTPUT_DIMS)
    # bf16 matmul operands -> small drift vs. the f32 reference; accumulation,
    # relu6 and sigmoid are f32, so outputs agree well within 2e-2.
    assert jnp.allclose(out, ref, atol=2e-2, rtol=2e-2), "mismatch vs reference"

    print("KERNEL_OK")
</pallas_src>

<mosaic_0001>
module attributes {stable_mosaic.version = 11 : i64} {
  func.func @fc_net_kernel(%arg0: i32, %arg1: memref<8x128xbf16, #tpu.memory_space<vmem>>, %arg2: memref<128x256xbf16, #tpu.memory_space<vmem>>, %arg3: memref<1x256xf32, #tpu.memory_space<vmem>>, %arg4: memref<256x128xbf16, #tpu.memory_space<vmem>>, %arg5: memref<1x128xf32, #tpu.memory_space<vmem>>, %arg6: memref<128x128xbf16, #tpu.memory_space<vmem>>, %arg7: memref<1x128xf32, #tpu.memory_space<vmem>>, %arg8: memref<8x128xf32, #tpu.memory_space<vmem>>) attributes {dimension_semantics = [#tpu.dimension_semantics<parallel>], iteration_bounds = array<i64: 1>, scalar_prefetch = 0 : i64, scratch_operands = 0 : i64, tpu.core_type = #tpu.core_type<tc>, window_params = [{transform_indices = @transform_0, window_bounds = array<i64: 8, 128>}, {pipeline_mode = #tpu.pipeline_mode<synchronous>, transform_indices = @transform_1, window_bounds = array<i64: 128, 256>}, {pipeline_mode = #tpu.pipeline_mode<synchronous>, transform_indices = @transform_2, window_bounds = array<i64: 1, 256>}, {pipeline_mode = #tpu.pipeline_mode<synchronous>, transform_indices = @transform_3, window_bounds = array<i64: 256, 128>}, {pipeline_mode = #tpu.pipeline_mode<synchronous>, transform_indices = @transform_4, window_bounds = array<i64: 1, 128>}, {pipeline_mode = #tpu.pipeline_mode<synchronous>, transform_indices = @transform_5, window_bounds = array<i64: 128, 128>}, {pipeline_mode = #tpu.pipeline_mode<synchronous>, transform_indices = @transform_6, window_bounds = array<i64: 1, 128>}, {transform_indices = @transform_7, window_bounds = array<i64: 8, 128>}]} {
    %c0 = arith.constant 0 : index
    %c0_0 = arith.constant 0 : index
    %0 = vector.load %arg1[%c0, %c0_0] : memref<8x128xbf16, #tpu.memory_space<vmem>>, vector<8x128xbf16>
    %c0_1 = arith.constant 0 : index
    %c0_2 = arith.constant 0 : index
    %1 = vector.load %arg2[%c0_1, %c0_2] : memref<128x256xbf16, #tpu.memory_space<vmem>>, vector<128x256xbf16>
    %cst = arith.constant dense<0.000000e+00> : vector<8x256xf32>
    %2 = tpu.matmul %0, %1, %cst {dimension_numbers = #tpu.dot_dimension_numbers<[1], [0], [0], [1], [0, 0, 1, 1], [], []>} : vector<8x128xbf16>, vector<128x256xbf16>, vector<8x256xf32> -> vector<8x256xf32>
    %c0_3 = arith.constant 0 : index
    %c0_4 = arith.constant 0 : index
    %3 = vector.load %arg3[%c0_3, %c0_4] : memref<1x256xf32, #tpu.memory_space<vmem>>, vector<1x256xf32>
    %4 = vector.broadcast %3 : vector<1x256xf32> to vector<8x256xf32>
    %5 = arith.addf %2, %4 : vector<8x256xf32>
    %cst_5 = arith.constant 0.000000e+00 : f32
    %cst_6 = arith.constant 6.000000e+00 : f32
    %6 = vector.broadcast %cst_5 : f32 to vector<8x256xf32>
    %7 = arith.maximumf %6, %5 : vector<8x256xf32>
    %8 = vector.broadcast %cst_6 : f32 to vector<8x256xf32>
    %9 = arith.minimumf %8, %7 : vector<8x256xf32>
    %10 = arith.truncf %9 : vector<8x256xf32> to vector<8x256xbf16>
    %c0_7 = arith.constant 0 : index
    %c0_8 = arith.constant 0 : index
    %11 = vector.load %arg4[%c0_7, %c0_8] : memref<256x128xbf16, #tpu.memory_space<vmem>>, vector<256x128xbf16>
    %cst_9 = arith.constant dense<0.000000e+00> : vector<8x128xf32>
    %12 = tpu.matmul %10, %11, %cst_9 {dimension_numbers = #tpu.dot_dimension_numbers<[1], [0], [0], [1], [0, 0, 1, 1], [], []>} : vector<8x256xbf16>, vector<256x128xbf16>, vector<8x128xf32> -> vector<8x128xf32>
    %c0_10 = arith.constant 0 : index
    %c0_11 = arith.constant 0 : index
    %13 = vector.load %arg5[%c0_10, %c0_11] : memref<1x128xf32, #tpu.memory_space<vmem>>, vector<1x128xf32>
    %14 = vector.broadcast %13 : vector<1x128xf32> to vector<8x128xf32>
    %15 = arith.addf %12, %14 : vector<8x128xf32>
    %cst_12 = arith.constant 0.000000e+00 : f32
    %cst_13 = arith.constant 6.000000e+00 : f32
    %16 = vector.broadcast %cst_12 : f32 to vector<8x128xf32>
    %17 = arith.maximumf %16, %15 : vector<8x128xf32>
    %18 = vector.broadcast %cst_13 : f32 to vector<8x128xf32>
    %19 = arith.minimumf %18, %17 : vector<8x128xf32>
    %20 = arith.truncf %19 : vector<8x128xf32> to vector<8x128xbf16>
    %c0_14 = arith.constant 0 : index
    %c0_15 = arith.constant 0 : index
    %21 = vector.load %arg6[%c0_14, %c0_15] : memref<128x128xbf16, #tpu.memory_space<vmem>>, vector<128x128xbf16>
    %cst_16 = arith.constant dense<0.000000e+00> : vector<8x128xf32>
    %22 = tpu.matmul %20, %21, %cst_16 {dimension_numbers = #tpu.dot_dimension_numbers<[1], [0], [0], [1], [0, 0, 1, 1], [], []>} : vector<8x128xbf16>, vector<128x128xbf16>, vector<8x128xf32> -> vector<8x128xf32>
    %c0_17 = arith.constant 0 : index
    %c0_18 = arith.constant 0 : index
    %23 = vector.load %arg7[%c0_17, %c0_18] : memref<1x128xf32, #tpu.memory_space<vmem>>, vector<1x128xf32>
    %24 = vector.broadcast %23 : vector<1x128xf32> to vector<8x128xf32>
    %25 = arith.addf %22, %24 : vector<8x128xf32>
    %26 = arith.negf %25 : vector<8x128xf32>
    %27 = math.exp %26 : vector<8x128xf32>
    %cst_19 = arith.constant 1.000000e+00 : f32
    %28 = vector.broadcast %cst_19 : f32 to vector<8x128xf32>
    %29 = arith.addf %28, %27 : vector<8x128xf32>
    %30 = arith.divf %28, %29 : vector<8x128xf32>
    %c0_20 = arith.constant 0 : index
    %c0_21 = arith.constant 0 : index
    %31 = vector.load %arg8[%c0_20, %c0_21] : memref<8x128xf32, #tpu.memory_space<vmem>>, vector<8x128xf32>
    tpu.vector_store %arg8[%c0_20, %c0_21], %30 {strides = array<i32>} : memref<8x128xf32, #tpu.memory_space<vmem>>, vector<8x128xf32>,
    return
  }
  func.func @transform_0(%arg0: i32) -> (i32, i32) {
    %c0_i32 = arith.constant 0 : i32
    %c0_i32_0 = arith.constant 0 : i32
    return %arg0, %c0_i32 : i32, i32
  }
  func.func @transform_1(%arg0: i32) -> (i32, i32) {
    %c0_i32 = arith.constant 0 : i32
    %c0_i32_0 = arith.constant 0 : i32
    %c0_i32_1 = arith.constant 0 : i32
    return %c0_i32, %c0_i32_0 : i32, i32
  }
  func.func @transform_2(%arg0: i32) -> (i32, i32) {
    %c0_i32 = arith.constant 0 : i32
    %c0_i32_0 = arith.constant 0 : i32
    %c0_i32_1 = arith.constant 0 : i32
    return %c0_i32, %c0_i32_0 : i32, i32
  }
  func.func @transform_3(%arg0: i32) -> (i32, i32) {
    %c0_i32 = arith.constant 0 : i32
    %c0_i32_0 = arith.constant 0 : i32
    %c0_i32_1 = arith.constant 0 : i32
    return %c0_i32, %c0_i32_0 : i32, i32
  }
  func.func @transform_4(%arg0: i32) -> (i32, i32) {
    %c0_i32 = arith.constant 0 : i32
    %c0_i32_0 = arith.constant 0 : i32
    %c0_i32_1 = arith.constant 0 : i32
    return %c0_i32, %c0_i32_0 : i32, i32
  }
  func.func @transform_5(%arg0: i32) -> (i32, i32) {
    %c0_i32 = arith.constant 0 : i32
    %c0_i32_0 = arith.constant 0 : i32
    %c0_i32_1 = arith.constant 0 : i32
    return %c0_i32, %c0_i32_0 : i32, i32
  }
  func.func @transform_6(%arg0: i32) -> (i32, i32) {
    %c0_i32 = arith.constant 0 : i32
    %c0_i32_0 = arith.constant 0 : i32
    %c0_i32_1 = arith.constant 0 : i32
    return %c0_i32, %c0_i32_0 : i32, i32
  }
  func.func @transform_7(%arg0: i32) -> (i32, i32) {
    %c0_i32 = arith.constant 0 : i32
    %c0_i32_0 = arith.constant 0 : i32
    return %arg0, %c0_i32 : i32, i32
  }
}

</mosaic_0001>

<llo_original>
// kernel: fc_net_forward.1
$region0: #{fc_net_forward.1}
  #allocation0 [shape = 'u32[]', space=smem, size = 0x4, offset = 0x4, fixed_abs, tag = 'smem constant byte address 0x4 - core index']
  #allocation1 [shape = 'u32[144,128]{1,0:T(1,128)}', space=vmem, size = 0x12000, scoped, tag = 'internal scratch']
  %s0 = inlined_call_operand.vmem [shape: bf16[8,128], index: 0, kind: input, shape index: {}]
  %s1 = inlined_call_operand.vmem [shape: bf16[128,256], index: 1, kind: input, shape index: {}]
  %s2 = inlined_call_operand.vmem [shape: f32[1,256], index: 2, kind: input, shape index: {}]
  %s3 = inlined_call_operand.vmem [shape: bf16[256,128], index: 3, kind: input, shape index: {}]
  %s4 = inlined_call_operand.vmem [shape: f32[1,128], index: 4, kind: input, shape index: {}]
  %s5 = inlined_call_operand.vmem [shape: bf16[128,128], index: 5, kind: input, shape index: {}]
  %s6 = inlined_call_operand.vmem [shape: f32[1,128], index: 6, kind: input, shape index: {}]
  %s7 = inlined_call_operand.hbm [shape: f32[8,128], index: 7, kind: output, shape index: {}]
  %s8 = sld [smem:[#allocation0]]
  $region38: #{fc_net_forward.1} parent=0
    _
  %s10 = ssub.s32 1, %s8
  %s11 = scalar_select 0, %s10, %s8
  $region1: #{fc_net_forward.1} parent=0
    #allocation2 [shape = 'u8[4096]{0}', space=vmem, size = 0x1000, scoped, tag = 'output window, operand 0, single buffered']
    #allocation3 [shape = 's32[1]{0}', space=sflag, size = 0x4, scoped, tag = 'scoped memory for fc_net_forward.1']
    %12 = vsyncpa [#allocation3], 0
    // Predicated region
    $region2: #{fc_net_forward.1} parent=1 // pred_check
      _
    $region3: #{fc_net_forward.1} parent=1 // pred_check_branch
      %14 = sbr.rel (0) target = $region5
    $region4: #{fc_net_forward.1} parent=1 // pred_region
      _
    $region5: #{fc_net_forward.1} parent=1 // pred_fallthru
      _
    // Predicated region
    $region6: #{fc_net_forward.1} parent=1 // pred_check
      _
    $region7: #{fc_net_forward.1} parent=1 // pred_check_branch
      %16 = sbr.rel (0) target = $region9
    $region8: #{fc_net_forward.1} parent=1 // pred_region
      _
    $region9: #{fc_net_forward.1} parent=1 // pred_fallthru
      _
    // Predicated region
    $region10: #{fc_net_forward.1} parent=1 // pred_check
      _
    $region11: #{fc_net_forward.1} parent=1 // pred_check_branch
      %18 = sbr.rel (0) target = $region13
    $region12: #{fc_net_forward.1} parent=1 // pred_region
      _
    $region13: #{fc_net_forward.1} parent=1 // pred_fallthru
      _
    // Predicated region
    $region14: #{fc_net_forward.1} parent=1 // pred_check
      _
    $region15: #{fc_net_forward.1} parent=1 // pred_check_branch
      %20 = sbr.rel (0) target = $region17
    $region16: #{fc_net_forward.1} parent=1 // pred_region
      _
    $region17: #{fc_net_forward.1} parent=1 // pred_fallthru
      _
    // Predicated region
    $region18: #{fc_net_forward.1} parent=1 // pred_check
      _
    $region19: #{fc_net_forward.1} parent=1 // pred_check_branch
      %22 = sbr.rel (0) target = $region21
    $region20: #{fc_net_forward.1} parent=1 // pred_region
      _
    $region21: #{fc_net_forward.1} parent=1 // pred_fallthru
      _
    // Predicated region
    $region22: #{fc_net_forward.1} parent=1 // pred_check
      _
    $region23: #{fc_net_forward.1} parent=1 // pred_check_branch
      %24 = sbr.rel (0) target = $region25
    $region24: #{fc_net_forward.1} parent=1 // pred_region
      _
    $region25: #{fc_net_forward.1} parent=1 // pred_fallthru
      _
    // Predicated region
    $region26: #{fc_net_forward.1} parent=1 // pred_check
      _
    $region27: #{fc_net_forward.1} parent=1 // pred_check_branch
      %26 = sbr.rel (0) target = $region29
    $region28: #{fc_net_forward.1} parent=1 // pred_region
      _
    $region29: #{fc_net_forward.1} parent=1 // pred_fallthru
      _
    %v28 = vld [vmem:[%s0] sm:$0xf]
    %v29 = vld [vmem:[%s1] sm:$0xff]
    %v30 = vld [vmem:[%s1 + $0x8] sm:$0xff]
    %v31 = vld [vmem:[%s1 + $0x10] sm:$0xff]
    %v32 = vld [vmem:[%s1 + $0x18] sm:$0xff]
    %v33 = vld [vmem:[%s1 + $0x20] sm:$0xff]
    %v34 = vld [vmem:[%s1 + $0x28] sm:$0xff]
    %v35 = vld [vmem:[%s1 + $0x30] sm:$0xff]
    %v36 = vld [vmem:[%s1 + $0x38] sm:$0xff]
    %v37 = vld [vmem:[%s1 + $0x40] sm:$0xff]
    %v38 = vld [vmem:[%s1 + $0x48] sm:$0xff]
    %v39 = vld [vmem:[%s1 + $0x50] sm:$0xff]
    %v40 = vld [vmem:[%s1 + $0x58] sm:$0xff]
    %v41 = vld [vmem:[%s1 + $0x60] sm:$0xff]
    %v42 = vld [vmem:[%s1 + $0x68] sm:$0xff]
    %v43 = vld [vmem:[%s1 + $0x70] sm:$0xff]
    %v44 = vld [vmem:[%s1 + $0x78] sm:$0xff]
    %v45 = vld [vmem:[%s2] sm:$0x3]
    %v47 = vlaneseq
    %v48 = vshrl.u32 %v47, 7
    %v49 = vsub.s32 0, %v48
    %v50 = vrot.slane %v45, %v49
    %v51 = vlaneseq
    %v52 = vshrl.u32 %v51, 7
    %v53 = vsub.s32 1, %v52
    %v54 = vrot.slane %v45, %v53
    %v73 = vunpack.c.l.b16 %v29
    %v74 = vunpack.c.h.b16 %v29
    %v75 = vunpack.c.l.b16 %v30
    %v76 = vunpack.c.h.b16 %v30
    %v77 = vunpack.c.l.b16 %v31
    %v78 = vunpack.c.h.b16 %v31
    %v79 = vunpack.c.l.b16 %v32
    %v80 = vunpack.c.h.b16 %v32
    %v81 = vunpack.c.l.b16 %v33
    %v82 = vunpack.c.h.b16 %v33
    %v83 = vunpack.c.l.b16 %v34
    %v84 = vunpack.c.h.b16 %v34
    %v85 = vunpack.c.l.b16 %v35
    %v86 = vunpack.c.h.b16 %v35
    %v87 = vunpack.c.l.b16 %v36
    %v88 = vunpack.c.h.b16 %v36
    %v89 = vunpack.c.l.b16 %v37
    %v90 = vunpack.c.h.b16 %v37
    %v91 = vunpack.c.l.b16 %v38
    %v92 = vunpack.c.h.b16 %v38
    %v93 = vunpack.c.l.b16 %v39
    %v94 = vunpack.c.h.b16 %v39
    %v95 = vunpack.c.l.b16 %v40
    %v96 = vunpack.c.h.b16 %v40
    %v97 = vunpack.c.l.b16 %v41
    %v98 = vunpack.c.h.b16 %v41
    %v99 = vunpack.c.l.b16 %v42
    %v100 = vunpack.c.h.b16 %v42
    %v101 = vunpack.c.l.b16 %v43
    %v102 = vunpack.c.h.b16 %v43
    %v103 = vunpack.c.l.b16 %v44
    %v104 = vunpack.c.h.b16 %v44
    %v105 = vpack.c.b16 %v75, %v73
    %v106 = vpack.c.b16 %v76, %v74
    %v107 = vpack.c.b16 %v79, %v77
    %v108 = vpack.c.b16 %v80, %v78
    %v109 = vpack.c.b16 %v83, %v81
    %v110 = vpack.c.b16 %v84, %v82
    %v111 = vpack.c.b16 %v87, %v85
    %v112 = vpack.c.b16 %v88, %v86
    %v113 = vpack.c.b16 %v91, %v89
    %v114 = vpack.c.b16 %v92, %v90
    %v115 = vpack.c.b16 %v95, %v93
    %v116 = vpack.c.b16 %v96, %v94
    %v117 = vpack.c.b16 %v99, %v97
    %v118 = vpack.c.b16 %v100, %v98
    %v119 = vpack.c.b16 %v103, %v101
    %v120 = vpack.c.b16 %v104, %v102
    %137 = vmatprep.subr.bf16.mxu0 %v106
    %138 = vmatpush1.bf16.msra.mxu0 %v105
    %139 = vmatprep.subr.bf16.mxu0 %v108
    %140 = vmatpush1.bf16.msra.mxu0 %v107
    %141 = vmatprep.subr.bf16.mxu0 %v110
    %142 = vmatpush1.bf16.msra.mxu0 %v109
    %143 = vmatprep.subr.bf16.mxu0 %v112
    %144 = vmatpush1.bf16.msra.mxu0 %v111
    %145 = vmatprep.subr.bf16.mxu0 %v114
    %146 = vmatpush1.bf16.msra.mxu0 %v113
    %147 = vmatprep.subr.bf16.mxu0 %v116
    %148 = vmatpush1.bf16.msra.mxu0 %v115
    %149 = vmatprep.subr.bf16.mxu0 %v118
    %150 = vmatpush1.bf16.msra.mxu0 %v117
    %151 = vmatprep.subr.bf16.mxu0 %v120
    %152 = vmatpush1.bf16.msra.mxu0 %v119
    %153 = vmatprep.subr.bf16.mxu0 0
    %154 = vmatpush1.bf16.msra.mxu0 0
    %155 = vmatprep.subr.bf16.mxu0 0
    %156 = vmatpush1.bf16.msra.mxu0 0
    %157 = vmatprep.subr.bf16.mxu0 0
    %158 = vmatpush1.bf16.msra.mxu0 0
    %159 = vmatprep.subr.bf16.mxu0 0
    %160 = vmatpush1.bf16.msra.mxu0 0
    %161 = vmatprep.subr.bf16.mxu0 0
    %162 = vmatpush1.bf16.msra.mxu0 0
    %163 = vmatprep.subr.bf16.mxu0 0
    %164 = vmatpush1.bf16.msra.mxu0 0
    %165 = vmatprep.subr.bf16.mxu0 0
    %166 = vmatpush1.bf16.msra.mxu0 0
    %167 = vmatprep.subr.bf16.mxu0 0
    %168 = vmatpush1.bf16.msra.mxu0 0
    %169 = vmatprep.mubr.bf16.mxu0 0
    %170 = vmatmul.mubr.bf16.gmra.mrb[0].mxu0 %v28
    %v171 = vpop.f32.mrb[0].mxu0
    %v172 = vadd.f32 %v50, %v171
    %v173 = vpop.f32.mrb[0].mxu0
    %v174 = vadd.f32 %v54, %v173
    %v175 = vpop.f32.mrb[0].mxu0
    %v176 = vpop.f32.mrb[0].mxu0
    %177 = vdwg.mxu0
    %v178 = vmax.f32 %v172, 0.0
    %v179 = vmax.f32 %v174, 0.0
    %v180 = vmin.f32 %v178, 6.0
    %v181 = vmin.f32 %v179, 6.0
    %v182 = vpack.c.bf16 %v180, %v180
    %v183 = vpack.c.bf16 %v181, %v181
    %v184 = vld [vmem:[%s3] sm:$0xf]
    %v185 = vld [vmem:[%s3 + $0x4] sm:$0xf]
    %v186 = vld [vmem:[%s3 + $0x8] sm:$0xf]
    %v187 = vld [vmem:[%s3 + $0xc] sm:$0xf]
    %v188 = vld [vmem:[%s3 + $0x10] sm:$0xf]
    %v189 = vld [vmem:[%s3 + $0x14] sm:$0xf]
    %v190 = vld [vmem:[%s3 + $0x18] sm:$0xf]
    %v191 = vld [vmem:[%s3 + $0x1c] sm:$0xf]
    %v192 = vld [vmem:[%s3 + $0x20] sm:$0xf]
    %v193 = vld [vmem:[%s3 + $0x24] sm:$0xf]
    %v194 = vld [vmem:[%s3 + $0x28] sm:$0xf]
    %v195 = vld [vmem:[%s3 + $0x2c] sm:$0xf]
    %v196 = vld [vmem:[%s3 + $0x30] sm:$0xf]
    %v197 = vld [vmem:[%s3 + $0x34] sm:$0xf]
    %v198 = vld [vmem:[%s3 + $0x38] sm:$0xf]
    %v199 = vld [vmem:[%s3 + $0x3c] sm:$0xf]
    %v200 = vld [vmem:[%s3 + $0x40] sm:$0xf]
    %v201 = vld [vmem:[%s3 + $0x44] sm:$0xf]
    %v202 = vld [vmem:[%s3 + $0x48] sm:$0xf]
    %v203 = vld [vmem:[%s3 + $0x4c] sm:$0xf]
    %v204 = vld [vmem:[%s3 + $0x50] sm:$0xf]
    %v205 = vld [vmem:[%s3 + $0x54] sm:$0xf]
    %v206 = vld [vmem:[%s3 + $0x58] sm:$0xf]
    %v207 = vld [vmem:[%s3 + $0x5c] sm:$0xf]
    %v208 = vld [vmem:[%s3 + $0x60] sm:$0xf]
    %v209 = vld [vmem:[%s3 + $0x64] sm:$0xf]
    %v210 = vld [vmem:[%s3 + $0x68] sm:$0xf]
    %v211 = vld [vmem:[%s3 + $0x6c] sm:$0xf]
    %v212 = vld [vmem:[%s3 + $0x70] sm:$0xf]
    %v213 = vld [vmem:[%s3 + $0x74] sm:$0xf]
    %v214 = vld [vmem:[%s3 + $0x78] sm:$0xf]
    %v215 = vld [vmem:[%s3 + $0x7c] sm:$0xf]
    %v216 = vld [vmem:[%s4] sm:$0x1]
    %v218 = vlaneseq
    %v219 = vshrl.u32 %v218, 7
    %v220 = vsub.s32 0, %v219
    %v221 = vrot.slane %v216, %v220
    %v255 = vunpack.c.l.b16 %v184
    %v256 = vunpack.c.l.b16 %v185
    %v257 = vunpack.c.l.b16 %v186
    %v258 = vunpack.c.l.b16 %v187
    %v259 = vunpack.c.l.b16 %v188
    %v260 = vunpack.c.l.b16 %v189
    %v261 = vunpack.c.l.b16 %v190
    %v262 = vunpack.c.l.b16 %v191
    %v263 = vunpack.c.l.b16 %v192
    %v264 = vunpack.c.l.b16 %v193
    %v265 = vunpack.c.l.b16 %v194
    %v266 = vunpack.c.l.b16 %v195
    %v267 = vunpack.c.l.b16 %v196
    %v268 = vunpack.c.l.b16 %v197
    %v269 = vunpack.c.l.b16 %v198
    %v270 = vunpack.c.l.b16 %v199
    %v271 = vunpack.c.l.b16 %v200
    %v272 = vunpack.c.l.b16 %v201
    %v273 = vunpack.c.l.b16 %v202
    %v274 = vunpack.c.l.b16 %v203
    %v275 = vunpack.c.l.b16 %v204
    %v276 = vunpack.c.l.b16 %v205
    %v277 = vunpack.c.l.b16 %v206
    %v278 = vunpack.c.l.b16 %v207
    %v279 = vunpack.c.l.b16 %v208
    %v280 = vunpack.c.l.b16 %v209
    %v281 = vunpack.c.l.b16 %v210
    %v282 = vunpack.c.l.b16 %v211
    %v283 = vunpack.c.l.b16 %v212
    %v284 = vunpack.c.l.b16 %v213
    %v285 = vunpack.c.l.b16 %v214
    %v286 = vunpack.c.l.b16 %v215
    %v287 = vpack.c.b16 %v256, %v255
    %v288 = vpack.c.b16 %v258, %v257
    %v289 = vpack.c.b16 %v260, %v259
    %v290 = vpack.c.b16 %v262, %v261
    %v291 = vpack.c.b16 %v264, %v263
    %v292 = vpack.c.b16 %v266, %v265
    %v293 = vpack.c.b16 %v268, %v267
    %v294 = vpack.c.b16 %v270, %v269
    %v295 = vpack.c.b16 %v272, %v271
    %v296 = vpack.c.b16 %v274, %v273
    %v297 = vpack.c.b16 %v276, %v275
    %v298 = vpack.c.b16 %v278, %v277
    %v299 = vpack.c.b16 %v280, %v279
    %v300 = vpack.c.b16 %v282, %v281
    %v301 = vpack.c.b16 %v284, %v283
    %v302 = vpack.c.b16 %v286, %v285
    %319 = vmatprep.subr.bf16.mxu0 0
    %320 = vmatpush1.bf16.msra.mxu0 %v287
    %321 = vmatprep.subr.bf16.mxu0 0
    %322 = vmatpush1.bf16.msra.mxu0 %v288
    %323 = vmatprep.subr.bf16.mxu0 0
    %324 = vmatpush1.bf16.msra.mxu0 %v289
    %325 = vmatprep.subr.bf16.mxu0 0
    %326 = vmatpush1.bf16.msra.mxu0 %v290
    %327 = vmatprep.subr.bf16.mxu0 0
    %328 = vmatpush1.bf16.msra.mxu0 %v291
    %329 = vmatprep.subr.bf16.mxu0 0
    %330 = vmatpush1.bf16.msra.mxu0 %v292
    %331 = vmatprep.subr.bf16.mxu0 0
    %332 = vmatpush1.bf16.msra.mxu0 %v293
    %333 = vmatprep.subr.bf16.mxu0 0
    %334 = vmatpush1.bf16.msra.mxu0 %v294
    %335 = vmatprep.subr.bf16.mxu0 0
    %336 = vmatpush1.bf16.msra.mxu0 %v295
    %337 = vmatprep.subr.bf16.mxu0 0
    %338 = vmatpush1.bf16.msra.mxu0 %v296
    %339 = vmatprep.subr.bf16.mxu0 0
    %340 = vmatpush1.bf16.msra.mxu0 %v297
    %341 = vmatprep.subr.bf16.mxu0 0
    %342 = vmatpush1.bf16.msra.mxu0 %v298
    %343 = vmatprep.subr.bf16.mxu0 0
    %344 = vmatpush1.bf16.msra.mxu0 %v299
    %345 = vmatprep.subr.bf16.mxu0 0
    %346 = vmatpush1.bf16.msra.mxu0 %v300
    %347 = vmatprep.subr.bf16.mxu0 0
    %348 = vmatpush1.bf16.msra.mxu0 %v301
    %349 = vmatprep.subr.bf16.mxu0 0
    %350 = vmatpush1.bf16.msra.mxu0 %v302
    %351 = vmatprep.mubr.bf16.mxu0 %v183
    %352 = vmatmul.mubr.bf16.gmra.mrb[0].mxu0 %v182
    %v353 = vpop.f32.mrb[0].mxu0
    %v354 = vadd.f32 %v221, %v353
    %v355 = vpop.f32.mrb[0].mxu0
    %v356 = vpop.f32.mrb[0].mxu0
    %v357 = vpop.f32.mrb[0].mxu0
    %358 = vdwg.mxu0
    %v359 = vmax.f32 %v354, 0.0
    %v360 = vmin.f32 %v359, 6.0
    %v361 = vpack.c.bf16 %v360, %v360
    %v362 = vld [vmem:[%s5] sm:$0xf]
    %v363 = vld [vmem:[%s5 + $0x4] sm:$0xf]
    %v364 = vld [vmem:[%s5 + $0x8] sm:$0xf]
    %v365 = vld [vmem:[%s5 + $0xc] sm:$0xf]
    %v366 = vld [vmem:[%s5 + $0x10] sm:$0xf]
    %v367 = vld [vmem:[%s5 + $0x14] sm:$0xf]
    %v368 = vld [vmem:[%s5 + $0x18] sm:$0xf]
    %v369 = vld [vmem:[%s5 + $0x1c] sm:$0xf]
    %v370 = vld [vmem:[%s5 + $0x20] sm:$0xf]
    %v371 = vld [vmem:[%s5 + $0x24] sm:$0xf]
    %v372 = vld [vmem:[%s5 + $0x28] sm:$0xf]
    %v373 = vld [vmem:[%s5 + $0x2c] sm:$0xf]
    %v374 = vld [vmem:[%s5 + $0x30] sm:$0xf]
    %v375 = vld [vmem:[%s5 + $0x34] sm:$0xf]
    %v376 = vld [vmem:[%s5 + $0x38] sm:$0xf]
    %v377 = vld [vmem:[%s5 + $0x3c] sm:$0xf]
    %v378 = vld [vmem:[%s6] sm:$0x1]
    %v380 = vlaneseq
    %v381 = vshrl.u32 %v380, 7
    %v382 = vsub.s32 0, %v381
    %v383 = vrot.slane %v378, %v382
    %v401 = vunpack.c.l.b16 %v362
    %v402 = vunpack.c.l.b16 %v363
    %v403 = vunpack.c.l.b16 %v364
    %v404 = vunpack.c.l.b16 %v365
    %v405 = vunpack.c.l.b16 %v366
    %v406 = vunpack.c.l.b16 %v367
    %v407 = vunpack.c.l.b16 %v368
    %v408 = vunpack.c.l.b16 %v369
    %v409 = vunpack.c.l.b16 %v370
    %v410 = vunpack.c.l.b16 %v371
    %v411 = vunpack.c.l.b16 %v372
    %v412 = vunpack.c.l.b16 %v373
    %v413 = vunpack.c.l.b16 %v374
    %v414 = vunpack.c.l.b16 %v375
    %v415 = vunpack.c.l.b16 %v376
    %v416 = vunpack.c.l.b16 %v377
    %v417 = vpack.c.b16 %v402, %v401
    %v418 = vpack.c.b16 %v404, %v403
    %v419 = vpack.c.b16 %v406, %v405
    %v420 = vpack.c.b16 %v408, %v407
    %v421 = vpack.c.b16 %v410, %v409
    %v422 = vpack.c.b16 %v412, %v411
    %v423 = vpack.c.b16 %v414, %v413
    %v424 = vpack.c.b16 %v416, %v415
    %433 = vmatprep.subr.bf16.mxu0 0
    %434 = vmatpush1.bf16.msra.mxu0 %v417
    %435 = vmatprep.subr.bf16.mxu0 0
    %436 = vmatpush1.bf16.msra.mxu0 %v418
    %437 = vmatprep.subr.bf16.mxu0 0
    %438 = vmatpush1.bf16.msra.mxu0 %v419
    %439 = vmatprep.subr.bf16.mxu0 0
    %440 = vmatpush1.bf16.msra.mxu0 %v420
    %441 = vmatprep.subr.bf16.mxu0 0
    %442 = vmatpush1.bf16.msra.mxu0 %v421
    %443 = vmatprep.subr.bf16.mxu0 0
    %444 = vmatpush1.bf16.msra.mxu0 %v422
    %445 = vmatprep.subr.bf16.mxu0 0
    %446 = vmatpush1.bf16.msra.mxu0 %v423
    %447 = vmatprep.subr.bf16.mxu0 0
    %448 = vmatpush1.bf16.msra.mxu0 %v424
    %449 = vmatprep.subr.bf16.mxu0 0
    %450 = vmatpush1.bf16.msra.mxu0 0
    %451 = vmatprep.subr.bf16.mxu0 0
    %452 = vmatpush1.bf16.msra.mxu0 0
    %453 = vmatprep.subr.bf16.mxu0 0
    %454 = vmatpush1.bf16.msra.mxu0 0
    %455 = vmatprep.subr.bf16.mxu0 0
    %456 = vmatpush1.bf16.msra.mxu0 0
    %457 = vmatprep.subr.bf16.mxu0 0
    %458 = vmatpush1.bf16.msra.mxu0 0
    %459 = vmatprep.subr.bf16.mxu0 0
    %460 = vmatpush1.bf16.msra.mxu0 0
    %461 = vmatprep.subr.bf16.mxu0 0
    %462 = vmatpush1.bf16.msra.mxu0 0
    %463 = vmatprep.subr.bf16.mxu0 0
    %464 = vmatpush1.bf16.msra.mxu0 0
    %465 = vmatprep.mubr.bf16.mxu0 0
    %466 = vmatmul.mubr.bf16.gmra.mrb[0].mxu0 %v361
    %v467 = vpop.f32.mrb[0].mxu0
    %v468 = vadd.f32 %v383, %v467
    %v469 = vpop.f32.mrb[0].mxu0
    %v470 = vpop.f32.mrb[0].mxu0
    %v471 = vpop.f32.mrb[0].mxu0
    %472 = vdwg.mxu0
    %v473 = vxor.u32 %v468, 2147483648
    %v474 = vmul.f32 %v473, 1.442695
    %v475 = vpow.pop %v474
    %v476 = vadd.f32 %v475, 1.0
    %v477 = vrcp.pop %v476
    %v478 = vmul.f32 1.0, %v477
    %479 = vst [vmem:[#allocation2] sm:$0xff] %v478
    // Predicated region
    $region30: #{fc_net_forward.1} parent=1 // pred_check
      _
    $region31: #{fc_net_forward.1} parent=1 // pred_check_branch
      %481 = sbr.rel (0) target = $region33
    $region32: #{fc_net_forward.1} parent=1 // pred_region
      %s483 = ssub.s32 128, 128
      %484 = vsyncadd [#allocation3], %s483
      %s486 = sshll.u32 [#allocation2], 4
      %s487 = int_to_ptr.vmem [resolvable:$true] %s486
      %489 = dma.vmem_to_hbm [thread:$0]  %s487, 128, %s7, [#allocation3]
    $region33: #{fc_net_forward.1} parent=1 // pred_fallthru
      _
    // Predicated region
    $region34: #{fc_net_forward.1} parent=1 // pred_check
      _
    $region35: #{fc_net_forward.1} parent=1 // pred_check_branch
      %491 = sbr.rel (0) target = $region37
    $region36: #{fc_net_forward.1} parent=1 // pred_region
      %492 = dma.done [#allocation3], 128
    $region37: #{fc_net_forward.1} parent=1 // pred_fallthru
      _
    %493 = vsyncpa [#allocation3], 1

</llo_original>
